<compile_context>
chip_gen: v7x
topology: tpu7x:2x2x1
jax: 0.10.0
libtpu: 0.0.40
codegen_flags: <defaults>
</compile_context>

<pallas_src>
import jax
import jax.numpy as jnp
from jax import lax
from jax.experimental import pallas as pl
from jax.experimental.pallas import tpu as pltpu


def _chunk(total, target):
    """Largest divisor of `total` that is <= target (static)."""
    ts = max(1, min(target, total))
    while total % ts:
        ts -= 1
    return ts


# ----------------------------------------------------------------------------
# Generic tiled 2-D matmul + bias kernel:  (M, K) @ (K, N) + (1, N).
# Used for the context-gate precompute and for the dense vocab projection.
# ----------------------------------------------------------------------------
def matmul_bias_kernel(x_ref, w_ref, b_ref, o_ref):
    o_ref[...] = (
        jnp.dot(x_ref[...], w_ref[...], preferred_element_type=jnp.float32)
        + b_ref[...]
    ).astype(o_ref.dtype)


def matmul_bias(x, w, b, *, tm=256, tn=512):
    M, K = x.shape
    N = w.shape[-1]
    tm = min(tm, M)
    tn = min(tn, N)
    if M % tm:
        tm = M
    if N % tn:
        tn = N
    return pl.pallas_call(
        matmul_bias_kernel,
        out_shape=jax.ShapeDtypeStruct((M, N), jnp.float32),
        grid_spec=pltpu.PrefetchScalarGridSpec(
            num_scalar_prefetch=0,
            grid=(M // tm, N // tn),
            in_specs=[
                pl.BlockSpec((tm, K), lambda i, j: (i, 0)),
                pl.BlockSpec((K, tn), lambda i, j: (0, j)),
                pl.BlockSpec((1, tn), lambda i, j: (0, j)),
            ],
            out_specs=pl.BlockSpec((tm, tn), lambda i, j: (i, j)),
        ),
        compiler_params=pltpu.CompilerParams(
            dimension_semantics=("parallel", "parallel")),
    )(x, w, b)


# ----------------------------------------------------------------------------
# Hoisted input projection: gi[s,b,:] = x[s,b,:] @ W + bias2d[b,:]
# Time axis is fully parallel (no recurrence), processed in chunks of Ts steps.
# bias2d carries the folded biases (and, for layer 0, the constant context
# contribution), so the recurrent kernel never touches W_ih again.
# ----------------------------------------------------------------------------
def input_proj_kernel(x_ref, w_ref, b_ref, o_ref):
    g = jnp.einsum("tbi,ig->tbg", x_ref[...], w_ref[...],
                   preferred_element_type=jnp.float32)
    o_ref[...] = (g + b_ref[...][None]).astype(o_ref.dtype)


def input_projection(x, w, bias2d, *, time_chunk=8):
    S, B, In = x.shape
    G = w.shape[-1]
    Ts = _chunk(S, time_chunk)
    return pl.pallas_call(
        input_proj_kernel,
        out_shape=jax.ShapeDtypeStruct((S, B, G), jnp.float32),
        grid_spec=pltpu.PrefetchScalarGridSpec(
            num_scalar_prefetch=0,
            grid=(S // Ts,),
            in_specs=[
                pl.BlockSpec((Ts, B, In), lambda c: (c, 0, 0)),
                pl.BlockSpec((In, G), lambda c: (0, 0)),
                pl.BlockSpec((B, G), lambda c: (0, 0)),
            ],
            out_specs=pl.BlockSpec((Ts, B, G), lambda c: (c, 0, 0)),
        ),
        compiler_params=pltpu.CompilerParams(
            dimension_semantics=("parallel",)),
    )(x, w, bias2d)


# ----------------------------------------------------------------------------
# GRU recurrence kernel.  Grid iterates sequentially over time CHUNKS; the
# hidden state is carried across chunks in a VMEM scratch.  Per step only the
# small (B,H)x(H,3H) dot + VPU gate math remains on the critical path.
# Gate ordering follows PyTorch: [r | z | n]; b_hn stays inside r*(...).
# NOTE: the time axis must stay "arbitrary" (sequential carry); do not flip it
# to "parallel".
# ----------------------------------------------------------------------------
def gru_recurrence_kernel(gi_ref, whh_ref, bhn_ref, h0_ref,
                          y_ref, hT_ref, h_scr):
    c = pl.program_id(0)

    @pl.when(c == 0)
    def _():
        h_scr[...] = h0_ref[...].astype(jnp.float32)

    H = h_scr.shape[-1]
    Ts = gi_ref.shape[0]
    whh = whh_ref[...]                                   # (H, 3H), loaded once/chunk
    bhn = jnp.broadcast_to(bhn_ref[...], h_scr.shape)    # hoisted broadcast (B, H)

    def step(i, h):
        gi = gi_ref[i]                                   # (B, 3H) precomputed gates
        gh = jnp.dot(h, whh, preferred_element_type=jnp.float32)
        r = jax.nn.sigmoid(gi[:, :H] + gh[:, :H])
        z = jax.nn.sigmoid(gi[:, H:2 * H] + gh[:, H:2 * H])
        n = jnp.tanh(gi[:, 2 * H:] + r * (gh[:, 2 * H:] + bhn))
        h_new = (1.0 - z) * n + z * h
        y_ref[i] = h_new.astype(y_ref.dtype)
        return h_new

    h_fin = lax.fori_loop(0, Ts, step, h_scr[...], unroll=True)
    h_scr[...] = h_fin
    hT_ref[...] = h_fin.astype(hT_ref.dtype)


def gru_recurrence(gi, w_hh, b_hn, h0, *, time_chunk=8):
    S, B, G = gi.shape
    H = h0.shape[-1]
    Ts = _chunk(S, time_chunk)
    y, hT = pl.pallas_call(
        gru_recurrence_kernel,
        out_shape=(jax.ShapeDtypeStruct((S, B, H), jnp.float32),
                   jax.ShapeDtypeStruct((B, H), jnp.float32)),
        grid_spec=pltpu.PrefetchScalarGridSpec(
            num_scalar_prefetch=0,
            grid=(S // Ts,),
            in_specs=[
                pl.BlockSpec((Ts, B, G), lambda c: (c, 0, 0)),
                pl.BlockSpec((H, G), lambda c: (0, 0)),
                pl.BlockSpec((1, H), lambda c: (0, 0)),
                pl.BlockSpec((B, H), lambda c: (0, 0)),
            ],
            out_specs=[
                pl.BlockSpec((Ts, B, H), lambda c: (c, 0, 0)),
                pl.BlockSpec((B, H), lambda c: (0, 0)),
            ],
            scratch_shapes=[pltpu.VMEM((B, H), jnp.float32)],
        ),
        compiler_params=pltpu.CompilerParams(
            dimension_semantics=("arbitrary",)),
    )(gi, w_hh, b_hn, h0)
    return y, hT


# ----------------------------------------------------------------------------
# Seq2SeqDecoder forward
# ----------------------------------------------------------------------------
def seq2seq_decoder_forward(params, X, state, *, time_chunk=8):
    """X: (batch, seq) int32 tokens; state: (num_layers, batch, num_hiddens)."""
    B, S = X.shape
    H = state.shape[-1]
    E = params["embedding"].shape[-1]

    # Embedding lookup is a tiny gather; done at the JAX level.
    # TODO(synk): embedding gather not implemented as a Pallas kernel (jnp.take).
    emb = jnp.take(params["embedding"], X, axis=0)       # (B, S, E)
    x = jnp.transpose(emb, (1, 0, 2))                    # (S, B, E) time-major

    new_state = []
    for l in range(len(params["gru"])):
        p = params["gru"][l]
        w_ih, w_hh = p["w_ih"], p["w_hh"]
        b_ih, b_hh = p["b_ih"], p["b_hh"]

        # Fold b_ih + (b_hr, b_hz) into the hoisted projection; keep b_hn
        # separate (it must be multiplied by r inside the recurrence).
        bias_folded = b_ih + jnp.concatenate(
            [b_hh[:, :2 * H], jnp.zeros((1, H), b_hh.dtype)], axis=1)  # (1, 3H)
        b_hn = b_hh[:, 2 * H:]                                          # (1, H)

        if l == 0:
            # Context (encoder final state) is time-invariant -> its gate
            # contribution becomes a per-batch bias computed once.
            w_ih_x, w_ih_ctx = w_ih[:E, :], w_ih[E:, :]
            bias2d = matmul_bias(state[-1], w_ih_ctx, bias_folded)      # (B, 3H)
            gi = input_projection(x, w_ih_x, bias2d, time_chunk=time_chunk)
        else:
            bias2d = jnp.broadcast_to(bias_folded, (B, 3 * H))
            gi = input_projection(x, w_ih, bias2d, time_chunk=time_chunk)

        x, hT = gru_recurrence(gi, w_hh, b_hn, state[l], time_chunk=time_chunk)
        new_state.append(hT)
    new_state = jnp.stack(new_state, axis=0)             # (L, B, H)

    # Dense projection as a tiled 2-D matmul over (S*B, H) x (H, V).
    logits = matmul_bias(x.reshape(S * B, H), params["dense_w"], params["dense_b"])
    out = logits.reshape(S, B, -1).transpose(1, 0, 2)    # (B, S, V)
    return out, new_state


# ----------------------------------------------------------------------------
# Pure-JAX reference (lax.scan, explicit concat — matches PyTorch semantics).
# ----------------------------------------------------------------------------
def gru_layer_ref(x, w_ih, w_hh, b_ih, b_hh, h0):
    H = h0.shape[-1]

    def step(h, xt):
        gi = xt @ w_ih + b_ih
        gh = h @ w_hh + b_hh
        r = jax.nn.sigmoid(gi[:, :H] + gh[:, :H])
        z = jax.nn.sigmoid(gi[:, H:2 * H] + gh[:, H:2 * H])
        n = jnp.tanh(gi[:, 2 * H:] + r * gh[:, 2 * H:])
        h_new = (1.0 - z) * n + z * h
        return h_new, h_new

    hT, ys = lax.scan(step, h0, x)
    return ys, hT


def reference_forward(params, X, state):
    emb = jnp.take(params["embedding"], X, axis=0)
    x = jnp.transpose(emb, (1, 0, 2))
    S = x.shape[0]
    context = jnp.broadcast_to(state[-1][None], (S,) + state[-1].shape)
    x = jnp.concatenate([x, context], axis=2)
    new_state = []
    for l in range(len(params["gru"])):
        p = params["gru"][l]
        x, hT = gru_layer_ref(x, p["w_ih"], p["w_hh"], p["b_ih"], p["b_hh"], state[l])
        new_state.append(hT)
    new_state = jnp.stack(new_state, axis=0)
    out = jnp.einsum("sbh,hv->sbv", x, params["dense_w"]) + params["dense_b"]
    return jnp.transpose(out, (1, 0, 2)), new_state


# ----------------------------------------------------------------------------
# Deterministic parameter construction (nn.Embedding / nn.GRU / nn.Linear
# shapes; weights stored pre-transposed for right-multiplication).
# ----------------------------------------------------------------------------
def make_params(key, vocab_size, embed_size, num_hiddens, num_layers):
    params = {}
    keys = jax.random.split(key, 3 + 4 * num_layers)
    params["embedding"] = 0.1 * jax.random.normal(
        keys[0], (vocab_size, embed_size), jnp.float32)
    gru = []
    for l in range(num_layers):
        in_dim = (embed_size + num_hiddens) if l == 0 else num_hiddens
        k = keys[3 + 4 * l: 3 + 4 * (l + 1)]
        gru.append({
            # PyTorch stores (3H, in) / (3H, H); we store the transpose.
            "w_ih": 0.1 * jax.random.normal(k[0], (in_dim, 3 * num_hiddens), jnp.float32),
            "w_hh": 0.1 * jax.random.normal(k[1], (num_hiddens, 3 * num_hiddens), jnp.float32),
            "b_ih": 0.1 * jax.random.normal(k[2], (1, 3 * num_hiddens), jnp.float32),
            "b_hh": 0.1 * jax.random.normal(k[3], (1, 3 * num_hiddens), jnp.float32),
        })
    params["gru"] = gru
    params["dense_w"] = 0.1 * jax.random.normal(
        keys[1], (num_hiddens, vocab_size), jnp.float32)
    params["dense_b"] = 0.1 * jax.random.normal(
        keys[2], (1, vocab_size), jnp.float32)
    return params


if __name__ == "__main__":
    vocab_size, embed_size, num_hiddens, num_layers = 32, 16, 32, 2
    batch, seq = 2, 8

    root = jax.random.PRNGKey(0)
    kp, kx, ks = jax.random.split(root, 3)
    params = make_params(kp, vocab_size, embed_size, num_hiddens, num_layers)

    X = jax.random.randint(kx, (batch, seq), 0, vocab_size, dtype=jnp.int32)
    # Decoder init_state: last hidden state of the encoder, (L, B, H).
    state = 0.1 * jax.random.normal(ks, (num_layers, batch, num_hiddens), jnp.float32)

    out, new_state = seq2seq_decoder_forward(params, X, state)
    out = jax.block_until_ready(out)
    new_state = jax.block_until_ready(new_state)

    ref_out, ref_state = reference_forward(params, X, state)
    assert out.shape == (batch, seq, vocab_size)
    assert new_state.shape == (num_layers, batch, num_hiddens)
    assert jnp.allclose(out, ref_out, atol=1e-4, rtol=1e-4)
    assert jnp.allclose(new_state, ref_state, atol=1e-4, rtol=1e-4)

    print("KERNEL_OK")
</pallas_src>

<mosaic_0001>
module attributes {stable_mosaic.version = 11 : i64} {
  func.func @matmul_bias_kernel(%arg0: i32, %arg1: i32, %arg2: memref<2x32xf32, #tpu.memory_space<vmem>>, %arg3: memref<32x96xf32, #tpu.memory_space<vmem>>, %arg4: memref<1x96xf32, #tpu.memory_space<vmem>>, %arg5: memref<2x96xf32, #tpu.memory_space<vmem>>) attributes {dimension_semantics = [#tpu.dimension_semantics<parallel>, #tpu.dimension_semantics<parallel>], iteration_bounds = array<i64: 1, 1>, scalar_prefetch = 0 : i64, scratch_operands = 0 : i64, tpu.core_type = #tpu.core_type<tc>, window_params = [{transform_indices = @transform_0, window_bounds = array<i64: 2, 32>}, {transform_indices = @transform_1, window_bounds = array<i64: 32, 96>}, {transform_indices = @transform_2, window_bounds = array<i64: 1, 96>}, {transform_indices = @transform_3, window_bounds = array<i64: 2, 96>}]} {
    %c0 = arith.constant 0 : index
    %c0_0 = arith.constant 0 : index
    %0 = vector.load %arg2[%c0, %c0_0] : memref<2x32xf32, #tpu.memory_space<vmem>>, vector<2x32xf32>
    %c0_1 = arith.constant 0 : index
    %c0_2 = arith.constant 0 : index
    %1 = vector.load %arg3[%c0_1, %c0_2] : memref<32x96xf32, #tpu.memory_space<vmem>>, vector<32x96xf32>
    %cst = arith.constant dense<0.000000e+00> : vector<2x96xf32>
    %2 = tpu.matmul %0, %1, %cst {dimension_numbers = #tpu.dot_dimension_numbers<[1], [0], [0], [1], [0, 0, 1, 1], [], []>} : vector<2x32xf32>, vector<32x96xf32>, vector<2x96xf32> -> vector<2x96xf32>
    %c0_3 = arith.constant 0 : index
    %c0_4 = arith.constant 0 : index
    %3 = vector.load %arg4[%c0_3, %c0_4] : memref<1x96xf32, #tpu.memory_space<vmem>>, vector<1x96xf32>
    %4 = vector.broadcast %3 : vector<1x96xf32> to vector<2x96xf32>
    %5 = arith.addf %2, %4 : vector<2x96xf32>
    %c0_5 = arith.constant 0 : index
    %c0_6 = arith.constant 0 : index
    %6 = vector.load %arg5[%c0_5, %c0_6] : memref<2x96xf32, #tpu.memory_space<vmem>>, vector<2x96xf32>
    tpu.vector_store %arg5[%c0_5, %c0_6], %5 {strides = array<i32>} : memref<2x96xf32, #tpu.memory_space<vmem>>, vector<2x96xf32>,
    return
  }
  func.func @transform_0(%arg0: i32, %arg1: i32) -> (i32, i32) {
    %c0_i32 = arith.constant 0 : i32
    %c0_i32_0 = arith.constant 0 : i32
    return %arg0, %c0_i32 : i32, i32
  }
  func.func @transform_1(%arg0: i32, %arg1: i32) -> (i32, i32) {
    %c0_i32 = arith.constant 0 : i32
    %c0_i32_0 = arith.constant 0 : i32
    return %c0_i32, %arg1 : i32, i32
  }
  func.func @transform_2(%arg0: i32, %arg1: i32) -> (i32, i32) {
    %c0_i32 = arith.constant 0 : i32
    %c0_i32_0 = arith.constant 0 : i32
    return %c0_i32, %arg1 : i32, i32
  }
  func.func @transform_3(%arg0: i32, %arg1: i32) -> (i32, i32) {
    %c0_i32 = arith.constant 0 : i32
    return %arg0, %arg1 : i32, i32
  }
}

</mosaic_0001>

<llo_original>
// kernel: tpu_custom_call.1
$region0: #{tpu_custom_call.1}
  #allocation0 [shape = 'u32[]', space=smem, size = 0x4, offset = 0x4, fixed_abs, tag = 'smem constant byte address 0x4 - core index']
  #allocation1 [shape = 'u32[144,128]{1,0:T(1,128)}', space=vmem, size = 0x12000, scoped, tag = 'internal scratch']
  %s0 = inlined_call_operand.hbm [shape: f32[2,32], index: 0, kind: input, shape index: {}]
  %s1 = inlined_call_operand.hbm [shape: f32[32,96], index: 1, kind: input, shape index: {}]
  %s2 = inlined_call_operand.vmem [shape: f32[1,96], index: 2, kind: input, shape index: {}]
  %s3 = inlined_call_operand.hbm [shape: f32[2,96], index: 3, kind: output, shape index: {}]
  %s4 = sld [smem:[#allocation0]]
  $region30: #{tpu_custom_call.1} parent=0
    _
  %s6 = ssub.s32 1, %s4
  %s7 = scalar_select 0, %s6, %s4
  $region1: #{tpu_custom_call.1} parent=0
    #allocation2 [shape = 'u8[1024]{0}', space=vmem, size = 0x400, scoped, tag = 'input window, operand 0, single buffered']
    #allocation3 [shape = 's32[1]{0}', space=sflag, size = 0x4, scoped, tag = 'scoped memory for tpu_custom_call.1']
    #allocation4 [shape = 's32[1]{0}', space=sflag, size = 0x4, scoped, tag = 'scoped memory for tpu_custom_call.1']
    #allocation5 [shape = 'u8[16384]{0}', space=vmem, size = 0x4000, scoped, tag = 'input window, operand 1, single buffered']
    #allocation6 [shape = 's32[1]{0}', space=sflag, size = 0x4, scoped, tag = 'scoped memory for tpu_custom_call.1']
    #allocation7 [shape = 'u8[1024]{0}', space=vmem, size = 0x400, scoped, tag = 'output window, operand 0, single buffered']
    %8 = vsyncpa [#allocation3], 0
    %9 = vsyncpa [#allocation6], 0
    %10 = vsyncpa [#allocation4], 0
    // Predicated region
    $region2: #{tpu_custom_call.1} parent=1 // pred_check
      _
    $region3: #{tpu_custom_call.1} parent=1 // pred_check_branch
      %12 = sbr.rel (0) target = $region5
    $region4: #{tpu_custom_call.1} parent=1 // pred_region
      %s14 = ssub.s32 32, 32
      %15 = vsyncadd [#allocation3], %s14
      %s17 = sshll.u32 [#allocation2], 4
      %s18 = int_to_ptr.vmem [resolvable:$true] %s17
      %20 = dma.hbm_to_vmem [thread:$0]  %s0, 32, %s18, [#allocation3]
    $region5: #{tpu_custom_call.1} parent=1 // pred_fallthru
      _
    // Predicated region
    $region6: #{tpu_custom_call.1} parent=1 // pred_check
      _
    $region7: #{tpu_custom_call.1} parent=1 // pred_check_branch
      %22 = sbr.rel (0) target = $region9
    $region8: #{tpu_custom_call.1} parent=1 // pred_region
      %s24 = ssub.s32 512, 512
      %25 = vsyncadd [#allocation6], %s24
      %s26 = sshll.u32 [#allocation5], 4
      %s27 = int_to_ptr.vmem [resolvable:$true] %s26
      %32 = dma.hbm_to_vmem [thread:$0]  %s1, 512, %s27, [#allocation6], 128, 128, 8
    $region9: #{tpu_custom_call.1} parent=1 // pred_fallthru
      _
    // Predicated region
    $region10: #{tpu_custom_call.1} parent=1 // pred_check
      _
    $region11: #{tpu_custom_call.1} parent=1 // pred_check_branch
      %34 = sbr.rel (0) target = $region13
    $region12: #{tpu_custom_call.1} parent=1 // pred_region
      _
    $region13: #{tpu_custom_call.1} parent=1 // pred_fallthru
      _
    // Predicated region
    $region14: #{tpu_custom_call.1} parent=1 // pred_check
      _
    $region15: #{tpu_custom_call.1} parent=1 // pred_check_branch
      %36 = sbr.rel (0) target = $region17
    $region16: #{tpu_custom_call.1} parent=1 // pred_region
      %37 = dma.done [#allocation3], 32
    $region17: #{tpu_custom_call.1} parent=1 // pred_fallthru
      _
    // Predicated region
    $region18: #{tpu_custom_call.1} parent=1 // pred_check
      _
    $region19: #{tpu_custom_call.1} parent=1 // pred_check_branch
      %39 = sbr.rel (0) target = $region21
    $region20: #{tpu_custom_call.1} parent=1 // pred_region
      %40 = dma.done [#allocation6], 512
    $region21: #{tpu_custom_call.1} parent=1 // pred_fallthru
      _
    %v41 = vld [vmem:[#allocation2] sm:$0x3]
    %v42 = vld [vmem:[#allocation5] sm:$0xff]
    %v43 = vld [vmem:[#allocation5 + $0x8] sm:$0xff]
    %v44 = vld [vmem:[#allocation5 + $0x10] sm:$0xff]
    %v45 = vld [vmem:[#allocation5 + $0x18] sm:$0xff]
    %v46 = vld [vmem:[%s2] sm:$0x1]
    %v48 = vlaneseq
    %v49 = vshrl.u32 %v48, 7
    %v50 = vsub.s32 0, %v49
    %v51 = vrot.slane %v46, %v50
    %vm53 = vcmask 261120
    %v55 = vsel %vm53, %v41, 0
    %57 = vmatprep.subr.mxu0 0.0
    %58 = vmatpush1.msra.mxu0 %v42
    %59 = vmatprep.subr.mxu0 0.0
    %60 = vmatpush1.msra.mxu0 %v43
    %61 = vmatprep.subr.mxu0 0.0
    %62 = vmatpush1.msra.mxu0 %v44
    %63 = vmatprep.subr.mxu0 0.0
    %64 = vmatpush1.msra.mxu0 %v45
    %65 = vmatprep.subr.mxu0 0.0
    %66 = vmatpush1.msra.mxu0 0.0
    %67 = vmatprep.subr.mxu0 0.0
    %68 = vmatpush1.msra.mxu0 0.0
    %69 = vmatprep.subr.mxu0 0.0
    %70 = vmatpush1.msra.mxu0 0.0
    %71 = vmatprep.subr.mxu0 0.0
    %72 = vmatpush1.msra.mxu0 0.0
    %73 = vmatprep.subr.mxu0 0.0
    %74 = vmatpush1.msra.mxu0 0.0
    %75 = vmatprep.subr.mxu0 0.0
    %76 = vmatpush1.msra.mxu0 0.0
    %77 = vmatprep.subr.mxu0 0.0
    %78 = vmatpush1.msra.mxu0 0.0
    %79 = vmatprep.subr.mxu0 0.0
    %80 = vmatpush1.msra.mxu0 0.0
    %81 = vmatprep.subr.mxu0 0.0
    %82 = vmatpush1.msra.mxu0 0.0
    %83 = vmatprep.subr.mxu0 0.0
    %84 = vmatpush1.msra.mxu0 0.0
    %85 = vmatprep.subr.mxu0 0.0
    %86 = vmatpush1.msra.mxu0 0.0
    %87 = vmatprep.subr.mxu0 0.0
    %88 = vmatpush1.msra.mxu0 0.0
    %89 = vmatprep.subr.mxu0 0.0
    %90 = vmatpush1.msra.mxu0 0.0
    %91 = vmatprep.subr.mxu0 0.0
    %92 = vmatpush1.msra.mxu0 0.0
    %93 = vmatprep.subr.mxu0 0.0
    %94 = vmatpush1.msra.mxu0 0.0
    %95 = vmatprep.subr.mxu0 0.0
    %96 = vmatpush1.msra.mxu0 0.0
    %97 = vmatprep.subr.mxu0 0.0
    %98 = vmatpush1.msra.mxu0 0.0
    %99 = vmatprep.subr.mxu0 0.0
    %100 = vmatpush1.msra.mxu0 0.0
    %101 = vmatprep.subr.mxu0 0.0
    %102 = vmatpush1.msra.mxu0 0.0
    %103 = vmatprep.subr.mxu0 0.0
    %104 = vmatpush1.msra.mxu0 0.0
    %105 = vmatprep.subr.mxu0 0.0
    %106 = vmatpush1.msra.mxu0 0.0
    %107 = vmatprep.subr.mxu0 0.0
    %108 = vmatpush1.msra.mxu0 0.0
    %109 = vmatprep.subr.mxu0 0.0
    %110 = vmatpush1.msra.mxu0 0.0
    %111 = vmatprep.subr.mxu0 0.0
    %112 = vmatpush1.msra.mxu0 0.0
    %113 = vmatprep.subr.mxu0 0.0
    %114 = vmatpush1.msra.mxu0 0.0
    %115 = vmatprep.subr.mxu0 0.0
    %116 = vmatpush1.msra.mxu0 0.0
    %117 = vmatprep.subr.mxu0 0.0
    %118 = vmatpush1.msra.mxu0 0.0
    %119 = vmatprep.subr.mxu0 0.0
    %120 = vmatpush1.msra.mxu0 0.0
    %121 = vmatprep.mubr.f32.mxu0 0.0
    %122 = vmatmul.mubr.f32.gmra.mrb[0].mxu0 %v55
    %v123 = vpop.f32.mrb[0].mxu0
    %v124 = vadd.f32 %v51, %v123
    %v125 = vpop.f32.mrb[0].mxu0
    %126 = vdwg.mxu0
    %vm127 = vcmask 779264
    %128 = vst.msk [vmem:[#allocation7] sm:$0x3] %vm127, %v124
    // Predicated region
    $region22: #{tpu_custom_call.1} parent=1 // pred_check
      _
    $region23: #{tpu_custom_call.1} parent=1 // pred_check_branch
      %130 = sbr.rel (0) target = $region25
    $region24: #{tpu_custom_call.1} parent=1 // pred_region
      %s132 = ssub.s32 32, 32
      %133 = vsyncadd [#allocation4], %s132
      %s135 = sshll.u32 [#allocation7], 4
      %s136 = int_to_ptr.vmem [resolvable:$true] %s135
      %138 = dma.vmem_to_hbm [thread:$0]  %s136, 32, %s3, [#allocation4]
    $region25: #{tpu_custom_call.1} parent=1 // pred_fallthru
      _
    // Predicated region
    $region26: #{tpu_custom_call.1} parent=1 // pred_check
      _
    $region27: #{tpu_custom_call.1} parent=1 // pred_check_branch
      %140 = sbr.rel (0) target = $region29
    $region28: #{tpu_custom_call.1} parent=1 // pred_region
      %141 = dma.done [#allocation4], 32
    $region29: #{tpu_custom_call.1} parent=1 // pred_fallthru
      _
    %142 = vsyncpa [#allocation3], 1
    %143 = vsyncpa [#allocation6], 1
    %144 = vsyncpa [#allocation4], 1

</llo_original>
